<compile_context>
chip_gen: v6e
topology: v6e:2x2x1
jax: 0.10.0
libtpu: 0.0.40
codegen_flags: <defaults>
</compile_context>

<pallas_src>
import numpy as np
import jax
import jax.numpy as jnp
from jax.experimental import pallas as pl
from jax.experimental.pallas import tpu as pltpu


def reach_detector_kernel(x_ref, mu0_ref, mu1_ref, a00_ref, a01_ref, a10_ref, a11_ref,
                          nlz_ref, lb0_ref, lb1_ref, o_ref):
    # x: (2, TB) — samples on lanes. Per-bin params: (N, 1) — bins on sublanes.
    x0 = x_ref[0:1, :]                               # (1, TB)
    x1 = x_ref[1:2, :]                               # (1, TB)
    row_has_nan = jnp.isnan(x0) | jnp.isnan(x1)      # (1, TB) bool

    # centered = x[b] - mu[n]   (sublane x lane broadcast -> (N, TB))
    c0 = x0 - mu0_ref[...]
    c1 = x1 - mu1_ref[...]
    # scaled = K^{-1/2}[n] @ centered, k = 2 fully unrolled (pure VPU; keep off the MXU).
    s0 = a00_ref[...] * c0 + a01_ref[...] * c1
    s1 = a10_ref[...] * c0 + a11_ref[...] * c1
    score = s0 * s0 + s1 * s1                        # Mahalanobis^2, (N, TB)

    # log_prob - mds  ==  -(log_Z + mds) - score   (constants folded in wrapper)
    lp = nlz_ref[...] - score                        # (N, TB)

    # add_bias: logaddexp(lp, log_bias[0] - mds), manual max + log1p form.
    # lp is never +inf (score >= 0) and the bias is finite, so this is exact.
    b0 = lb0_ref[...]                                # (N, 1)
    amax = jnp.maximum(lp, b0)
    scores = amax + jnp.log1p(jnp.exp(-jnp.abs(lp - b0)))

    # NaN rows propagate NaN through lp/scores; overwrite with the precomputed value
    # logaddexp(-inf, log_bias[1]) - mds == log_bias[1] - mds.
    o_ref[...] = jnp.where(row_has_nan, lb1_ref[...], scores)


def reach_detector_forward(hand_detections, bin_means, bin_precs_sqrt, bin_logZs,
                           mean_detection_scores, log_biases, tb_max=2048):
    """Pallas implementation of ReachDetector.forward (returns bin_scores, shape (B, N))."""
    B = hand_detections.shape[0]
    N = bin_means.shape[0]
    LANE = 128

    # Sample-axis tiling: TB lanes per grid step (multiple of 128), pad B up to grid*TB.
    if B <= tb_max:
        TB = max(LANE, ((B + LANE - 1) // LANE) * LANE)
        B_pad = TB
    else:
        TB = tb_max
        B_pad = ((B + TB - 1) // TB) * TB

    # Glue: samples on lanes, bins on sublanes.
    x = hand_detections.astype(jnp.float32).T                        # (2, B)
    if B_pad != B:
        x = jnp.pad(x, ((0, 0), (0, B_pad - B)))                     # pad columns discarded later

    mu = bin_means.astype(jnp.float32)                               # (N, 2)
    a = bin_precs_sqrt.astype(jnp.float32).reshape(N, 4)             # (N, 4) = [a00,a01,a10,a11]
    logz = bin_logZs.astype(jnp.float32).reshape(N, 1)
    mds = mean_detection_scores.astype(jnp.float32).reshape(N, 1)
    logb = log_biases.astype(jnp.float32)

    mu0, mu1 = mu[:, 0:1], mu[:, 1:2]
    a00, a01, a10, a11 = a[:, 0:1], a[:, 1:2], a[:, 2:3], a[:, 3:4]
    nlz = -(logz + mds)          # folded: -(log_Z + mean_detection_scores)
    lb0 = logb[0] - mds          # bias (detection present), pre-normalized
    lb1 = logb[1] - mds          # bias (detection missing), pre-normalized

    param_spec = pl.BlockSpec((N, 1), lambda i: (0, 0))

    out_t = pl.pallas_call(
        reach_detector_kernel,
        out_shape=jax.ShapeDtypeStruct((N, B_pad), jnp.float32),
        grid=(B_pad // TB,),
        in_specs=[
            pl.BlockSpec((2, TB), lambda i: (0, i)),                 # x block (samples on lanes)
            param_spec, param_spec,                                  # mu0, mu1
            param_spec, param_spec, param_spec, param_spec,          # a00, a01, a10, a11
            param_spec,                                              # -(logZ + mds)
            param_spec, param_spec,                                  # log_bias[0]-mds, log_bias[1]-mds
        ],
        out_specs=pl.BlockSpec((N, TB), lambda i: (0, i)),           # lane-dense output
        compiler_params=pltpu.CompilerParams(
            dimension_semantics=("parallel",)),                      # megacore sharding on v7x
    )(x, mu0, mu1, a00, a01, a10, a11, nlz, lb0, lb1)

    return out_t[:, :B].T                                            # (num_samples, num_bins)


def reach_detector_reference(x, mu, A, logz, mds, logb):
    """Pure-numpy replica of the PyTorch forward (for correctness check)."""
    x = np.asarray(x, np.float32)
    row_has_nan = np.isnan(x).any(1)
    centered = x[:, :, None] - mu.T[None]                    # (B, k, N)
    scaled = np.einsum('nij,bjn->bin', A, centered)
    score = np.einsum('bin,bin->bn', scaled, scaled)
    log_prob = -score - logz[None, :]
    bin_scores = np.where(row_has_nan[:, None], -np.inf, log_prob)
    bias = np.where(row_has_nan, logb[1], logb[0])[:, None]
    bin_scores = np.logaddexp(bin_scores, bias)
    return bin_scores - mds[None, :]


def _make_params(key, N):
    k2, k3, k4, k5 = jax.random.split(key, 4)
    bin_means = jax.random.normal(k2, (N, 2), jnp.float32)
    bin_precs_sqrt = (jnp.eye(2, dtype=jnp.float32)[None, :, :]
                      + 0.1 * jax.random.normal(k3, (N, 2, 2), jnp.float32))
    bin_logZs = 1.0 + 0.5 * jax.random.normal(k4, (N,), jnp.float32)
    mean_detection_scores = -2.0 + 0.3 * jax.random.normal(k5, (N,), jnp.float32)
    return bin_means, bin_precs_sqrt, bin_logZs, mean_detection_scores


if __name__ == "__main__":
    # Module config (synthetic, deterministic).
    part_names = ("p0", "p1", "p2", "p3", "p4", "p5")           # num_parts = 6
    part_idxs_to_bins = np.array([0, 0, 1, 1, 2, 3], np.int32)  # -> num_bins = 4
    num_bins = int(len(np.unique(part_idxs_to_bins)))
    bias_params = (0.01, 0.1)

    N = num_bins
    key = jax.random.PRNGKey(0)
    kp, k1, k6 = jax.random.split(key, 3)
    bin_means, bin_precs_sqrt, bin_logZs, mean_detection_scores = _make_params(kp, N)
    log_biases = jnp.log(jnp.array(bias_params, jnp.float32))

    # --- case 1: small batch (single tile) ---
    B = 8
    hand_detections = jax.random.normal(k1, (B, 2), jnp.float32) * 2.0 + 1.0
    hand_detections = hand_detections.at[2, :].set(jnp.nan)     # missing detections
    hand_detections = hand_detections.at[5, :].set(jnp.nan)

    out = reach_detector_forward(hand_detections, bin_means, bin_precs_sqrt,
                                 bin_logZs, mean_detection_scores, log_biases)
    out = jax.block_until_ready(out)
    ref = reach_detector_reference(np.asarray(hand_detections), np.asarray(bin_means),
                                   np.asarray(bin_precs_sqrt), np.asarray(bin_logZs),
                                   np.asarray(mean_detection_scores), np.asarray(log_biases))
    assert out.shape == (B, N)
    assert np.allclose(np.asarray(out), ref, rtol=1e-5, atol=1e-4), "mismatch vs reference (B=8)"

    # --- case 2: non-multiple batch with multiple grid steps (exercises padding + pipeline) ---
    B2 = 300
    hd2 = jax.random.normal(k6, (B2, 2), jnp.float32) * 2.0 + 1.0
    hd2 = hd2.at[7, 0].set(jnp.nan)
    hd2 = hd2.at[199, :].set(jnp.nan)
    out2 = reach_detector_forward(hd2, bin_means, bin_precs_sqrt,
                                  bin_logZs, mean_detection_scores, log_biases, tb_max=128)
    out2 = jax.block_until_ready(out2)
    ref2 = reach_detector_reference(np.asarray(hd2), np.asarray(bin_means),
                                    np.asarray(bin_precs_sqrt), np.asarray(bin_logZs),
                                    np.asarray(mean_detection_scores), np.asarray(log_biases))
    assert out2.shape == (B2, N)
    assert np.allclose(np.asarray(out2), ref2, rtol=1e-5, atol=1e-4), "mismatch vs reference (B=300)"

    print("KERNEL_OK")
</pallas_src>

<mosaic_0001>
module attributes {stable_mosaic.version = 11 : i64} {
  func.func @reach_detector_kernel(%arg0: i32, %arg1: memref<2x128xf32, #tpu.memory_space<vmem>>, %arg2: memref<4x1xf32, #tpu.memory_space<vmem>>, %arg3: memref<4x1xf32, #tpu.memory_space<vmem>>, %arg4: memref<4x1xf32, #tpu.memory_space<vmem>>, %arg5: memref<4x1xf32, #tpu.memory_space<vmem>>, %arg6: memref<4x1xf32, #tpu.memory_space<vmem>>, %arg7: memref<4x1xf32, #tpu.memory_space<vmem>>, %arg8: memref<4x1xf32, #tpu.memory_space<vmem>>, %arg9: memref<4x1xf32, #tpu.memory_space<vmem>>, %arg10: memref<4x1xf32, #tpu.memory_space<vmem>>, %arg11: memref<4x128xf32, #tpu.memory_space<vmem>>) attributes {dimension_semantics = [#tpu.dimension_semantics<parallel>], iteration_bounds = array<i64: 1>, scalar_prefetch = 0 : i64, scratch_operands = 0 : i64, tpu.core_type = #tpu.core_type<tc>, window_params = [{transform_indices = @transform_0, window_bounds = array<i64: 2, 128>}, {pipeline_mode = #tpu.pipeline_mode<synchronous>, transform_indices = @transform_1, window_bounds = array<i64: 4, 1>}, {pipeline_mode = #tpu.pipeline_mode<synchronous>, transform_indices = @transform_2, window_bounds = array<i64: 4, 1>}, {pipeline_mode = #tpu.pipeline_mode<synchronous>, transform_indices = @transform_3, window_bounds = array<i64: 4, 1>}, {pipeline_mode = #tpu.pipeline_mode<synchronous>, transform_indices = @transform_4, window_bounds = array<i64: 4, 1>}, {pipeline_mode = #tpu.pipeline_mode<synchronous>, transform_indices = @transform_5, window_bounds = array<i64: 4, 1>}, {pipeline_mode = #tpu.pipeline_mode<synchronous>, transform_indices = @transform_6, window_bounds = array<i64: 4, 1>}, {pipeline_mode = #tpu.pipeline_mode<synchronous>, transform_indices = @transform_7, window_bounds = array<i64: 4, 1>}, {pipeline_mode = #tpu.pipeline_mode<synchronous>, transform_indices = @transform_8, window_bounds = array<i64: 4, 1>}, {pipeline_mode = #tpu.pipeline_mode<synchronous>, transform_indices = @transform_9, window_bounds = array<i64: 4, 1>}, {transform_indices = @transform_10, window_bounds = array<i64: 4, 128>}]} {
    %c0 = arith.constant 0 : index
    %c0_0 = arith.constant 0 : index
    %0 = vector.load %arg1[%c0, %c0_0] : memref<2x128xf32, #tpu.memory_space<vmem>>, vector<1x128xf32>
    %c1 = arith.constant 1 : index
    %c0_1 = arith.constant 0 : index
    %1 = vector.load %arg1[%c1, %c0_1] : memref<2x128xf32, #tpu.memory_space<vmem>>, vector<1x128xf32>
    %2 = arith.cmpf one, %0, %0 : vector<1x128xf32>
    %3 = arith.cmpf one, %1, %1 : vector<1x128xf32>
    %4 = arith.ori %2, %3 : vector<1x128xi1>
    %c0_2 = arith.constant 0 : index
    %c0_3 = arith.constant 0 : index
    %5 = vector.load %arg2[%c0_2, %c0_3] : memref<4x1xf32, #tpu.memory_space<vmem>>, vector<4x1xf32>
    %6 = vector.broadcast %0 : vector<1x128xf32> to vector<4x128xf32>
    %7 = vector.broadcast %5 : vector<4x1xf32> to vector<4x128xf32>
    %8 = arith.subf %6, %7 : vector<4x128xf32>
    %c0_4 = arith.constant 0 : index
    %c0_5 = arith.constant 0 : index
    %9 = vector.load %arg3[%c0_4, %c0_5] : memref<4x1xf32, #tpu.memory_space<vmem>>, vector<4x1xf32>
    %10 = vector.broadcast %1 : vector<1x128xf32> to vector<4x128xf32>
    %11 = vector.broadcast %9 : vector<4x1xf32> to vector<4x128xf32>
    %12 = arith.subf %10, %11 : vector<4x128xf32>
    %c0_6 = arith.constant 0 : index
    %c0_7 = arith.constant 0 : index
    %13 = vector.load %arg4[%c0_6, %c0_7] : memref<4x1xf32, #tpu.memory_space<vmem>>, vector<4x1xf32>
    %14 = vector.broadcast %13 : vector<4x1xf32> to vector<4x128xf32>
    %15 = arith.mulf %14, %8 : vector<4x128xf32>
    %c0_8 = arith.constant 0 : index
    %c0_9 = arith.constant 0 : index
    %16 = vector.load %arg5[%c0_8, %c0_9] : memref<4x1xf32, #tpu.memory_space<vmem>>, vector<4x1xf32>
    %17 = vector.broadcast %16 : vector<4x1xf32> to vector<4x128xf32>
    %18 = arith.mulf %17, %12 : vector<4x128xf32>
    %19 = arith.addf %15, %18 : vector<4x128xf32>
    %c0_10 = arith.constant 0 : index
    %c0_11 = arith.constant 0 : index
    %20 = vector.load %arg6[%c0_10, %c0_11] : memref<4x1xf32, #tpu.memory_space<vmem>>, vector<4x1xf32>
    %21 = vector.broadcast %20 : vector<4x1xf32> to vector<4x128xf32>
    %22 = arith.mulf %21, %8 : vector<4x128xf32>
    %c0_12 = arith.constant 0 : index
    %c0_13 = arith.constant 0 : index
    %23 = vector.load %arg7[%c0_12, %c0_13] : memref<4x1xf32, #tpu.memory_space<vmem>>, vector<4x1xf32>
    %24 = vector.broadcast %23 : vector<4x1xf32> to vector<4x128xf32>
    %25 = arith.mulf %24, %12 : vector<4x128xf32>
    %26 = arith.addf %22, %25 : vector<4x128xf32>
    %27 = arith.mulf %19, %19 : vector<4x128xf32>
    %28 = arith.mulf %26, %26 : vector<4x128xf32>
    %29 = arith.addf %27, %28 : vector<4x128xf32>
    %c0_14 = arith.constant 0 : index
    %c0_15 = arith.constant 0 : index
    %30 = vector.load %arg8[%c0_14, %c0_15] : memref<4x1xf32, #tpu.memory_space<vmem>>, vector<4x1xf32>
    %31 = vector.broadcast %30 : vector<4x1xf32> to vector<4x128xf32>
    %32 = arith.subf %31, %29 : vector<4x128xf32>
    %c0_16 = arith.constant 0 : index
    %c0_17 = arith.constant 0 : index
    %33 = vector.load %arg9[%c0_16, %c0_17] : memref<4x1xf32, #tpu.memory_space<vmem>>, vector<4x1xf32>
    %34 = vector.broadcast %33 : vector<4x1xf32> to vector<4x128xf32>
    %35 = arith.maximumf %32, %34 : vector<4x128xf32>
    %36 = vector.broadcast %33 : vector<4x1xf32> to vector<4x128xf32>
    %37 = arith.subf %32, %36 : vector<4x128xf32>
    %38 = math.absf %37 : vector<4x128xf32>
    %cst = arith.constant 0.000000e+00 : f32
    %39 = vector.broadcast %cst : f32 to vector<4x128xf32>
    %40 = arith.subf %39, %38 : vector<4x128xf32>
    %41 = math.exp %40 : vector<4x128xf32>
    %42 = math.log1p %41 : vector<4x128xf32>
    %43 = arith.addf %35, %42 : vector<4x128xf32>
    %c0_18 = arith.constant 0 : index
    %c0_19 = arith.constant 0 : index
    %44 = vector.load %arg10[%c0_18, %c0_19] : memref<4x1xf32, #tpu.memory_space<vmem>>, vector<4x1xf32>
    %45 = vector.shape_cast %4 : vector<1x128xi1> to vector<1x128xi1>
    %46 = vector.broadcast %45 : vector<1x128xi1> to vector<4x128xi1>
    %47 = vector.shape_cast %44 : vector<4x1xf32> to vector<4x1xf32>
    %48 = vector.broadcast %47 : vector<4x1xf32> to vector<4x128xf32>
    %49 = arith.select %46, %48, %43 : vector<4x128xi1>, vector<4x128xf32>
    %c0_20 = arith.constant 0 : index
    %c0_21 = arith.constant 0 : index
    %50 = vector.load %arg11[%c0_20, %c0_21] : memref<4x128xf32, #tpu.memory_space<vmem>>, vector<4x128xf32>
    tpu.vector_store %arg11[%c0_20, %c0_21], %49 {strides = array<i32>} : memref<4x128xf32, #tpu.memory_space<vmem>>, vector<4x128xf32>,
    return
  }
  func.func @transform_0(%arg0: i32) -> (i32, i32) {
    %c0_i32 = arith.constant 0 : i32
    %c0_i32_0 = arith.constant 0 : i32
    return %c0_i32, %arg0 : i32, i32
  }
  func.func @transform_1(%arg0: i32) -> (i32, i32) {
    %c0_i32 = arith.constant 0 : i32
    %c0_i32_0 = arith.constant 0 : i32
    %c0_i32_1 = arith.constant 0 : i32
    return %c0_i32, %c0_i32_0 : i32, i32
  }
  func.func @transform_2(%arg0: i32) -> (i32, i32) {
    %c0_i32 = arith.constant 0 : i32
    %c0_i32_0 = arith.constant 0 : i32
    %c0_i32_1 = arith.constant 0 : i32
    return %c0_i32, %c0_i32_0 : i32, i32
  }
  func.func @transform_3(%arg0: i32) -> (i32, i32) {
    %c0_i32 = arith.constant 0 : i32
    %c0_i32_0 = arith.constant 0 : i32
    %c0_i32_1 = arith.constant 0 : i32
    return %c0_i32, %c0_i32_0 : i32, i32
  }
  func.func @transform_4(%arg0: i32) -> (i32, i32) {
    %c0_i32 = arith.constant 0 : i32
    %c0_i32_0 = arith.constant 0 : i32
    %c0_i32_1 = arith.constant 0 : i32
    return %c0_i32, %c0_i32_0 : i32, i32
  }
  func.func @transform_5(%arg0: i32) -> (i32, i32) {
    %c0_i32 = arith.constant 0 : i32
    %c0_i32_0 = arith.constant 0 : i32
    %c0_i32_1 = arith.constant 0 : i32
    return %c0_i32, %c0_i32_0 : i32, i32
  }
  func.func @transform_6(%arg0: i32) -> (i32, i32) {
    %c0_i32 = arith.constant 0 : i32
    %c0_i32_0 = arith.constant 0 : i32
    %c0_i32_1 = arith.constant 0 : i32
    return %c0_i32, %c0_i32_0 : i32, i32
  }
  func.func @transform_7(%arg0: i32) -> (i32, i32) {
    %c0_i32 = arith.constant 0 : i32
    %c0_i32_0 = arith.constant 0 : i32
    %c0_i32_1 = arith.constant 0 : i32
    return %c0_i32, %c0_i32_0 : i32, i32
  }
  func.func @transform_8(%arg0: i32) -> (i32, i32) {
    %c0_i32 = arith.constant 0 : i32
    %c0_i32_0 = arith.constant 0 : i32
    %c0_i32_1 = arith.constant 0 : i32
    return %c0_i32, %c0_i32_0 : i32, i32
  }
  func.func @transform_9(%arg0: i32) -> (i32, i32) {
    %c0_i32 = arith.constant 0 : i32
    %c0_i32_0 = arith.constant 0 : i32
    %c0_i32_1 = arith.constant 0 : i32
    return %c0_i32, %c0_i32_0 : i32, i32
  }
  func.func @transform_10(%arg0: i32) -> (i32, i32) {
    %c0_i32 = arith.constant 0 : i32
    %c0_i32_0 = arith.constant 0 : i32
    return %c0_i32, %arg0 : i32, i32
  }
}

</mosaic_0001>

<llo_original>
// kernel: tpu_custom_call.1
$region0: #{tpu_custom_call.1}
  #allocation0 [shape = 'u32[]', space=smem, size = 0x4, offset = 0x4, fixed_abs, tag = 'smem constant byte address 0x4 - core index']
  #allocation1 [shape = 'u32[144,128]{1,0:T(1,128)}', space=vmem, size = 0x12000, scoped, tag = 'internal scratch']
  %s0 = inlined_call_operand.vmem [shape: f32[2,128], index: 0, kind: input, shape index: {}]
  %s1 = inlined_call_operand.vmem [shape: f32[4,1], index: 1, kind: input, shape index: {}]
  %s2 = inlined_call_operand.vmem [shape: f32[4,1], index: 2, kind: input, shape index: {}]
  %s3 = inlined_call_operand.vmem [shape: f32[4,1], index: 3, kind: input, shape index: {}]
  %s4 = inlined_call_operand.vmem [shape: f32[4,1], index: 4, kind: input, shape index: {}]
  %s5 = inlined_call_operand.vmem [shape: f32[4,1], index: 5, kind: input, shape index: {}]
  %s6 = inlined_call_operand.vmem [shape: f32[4,1], index: 6, kind: input, shape index: {}]
  %s7 = inlined_call_operand.vmem [shape: f32[4,1], index: 7, kind: input, shape index: {}]
  %s8 = inlined_call_operand.vmem [shape: f32[4,1], index: 8, kind: input, shape index: {}]
  %s9 = inlined_call_operand.vmem [shape: f32[4,1], index: 9, kind: input, shape index: {}]
  %s10 = inlined_call_operand.hbm [shape: f32[4,128], index: 10, kind: output, shape index: {}]
  %s11 = sld [smem:[#allocation0]]
  $region50: #{tpu_custom_call.1} parent=0
    _
  %s13 = ssub.s32 1, %s11
  %s14 = scalar_select 0, %s13, %s11
  $region1: #{tpu_custom_call.1} parent=0
    #allocation2 [shape = 'u8[2048]{0}', space=vmem, size = 0x800, scoped, tag = 'output window, operand 0, single buffered']
    #allocation3 [shape = 's32[1]{0}', space=sflag, size = 0x4, scoped, tag = 'scoped memory for tpu_custom_call.1']
    %15 = vsyncpa [#allocation3], 0
    // Predicated region
    $region2: #{tpu_custom_call.1} parent=1 // pred_check
      _
    $region3: #{tpu_custom_call.1} parent=1 // pred_check_branch
      %17 = sbr.rel (0) target = $region5
    $region4: #{tpu_custom_call.1} parent=1 // pred_region
      _
    $region5: #{tpu_custom_call.1} parent=1 // pred_fallthru
      _
    // Predicated region
    $region6: #{tpu_custom_call.1} parent=1 // pred_check
      _
    $region7: #{tpu_custom_call.1} parent=1 // pred_check_branch
      %19 = sbr.rel (0) target = $region9
    $region8: #{tpu_custom_call.1} parent=1 // pred_region
      _
    $region9: #{tpu_custom_call.1} parent=1 // pred_fallthru
      _
    // Predicated region
    $region10: #{tpu_custom_call.1} parent=1 // pred_check
      _
    $region11: #{tpu_custom_call.1} parent=1 // pred_check_branch
      %21 = sbr.rel (0) target = $region13
    $region12: #{tpu_custom_call.1} parent=1 // pred_region
      _
    $region13: #{tpu_custom_call.1} parent=1 // pred_fallthru
      _
    // Predicated region
    $region14: #{tpu_custom_call.1} parent=1 // pred_check
      _
    $region15: #{tpu_custom_call.1} parent=1 // pred_check_branch
      %23 = sbr.rel (0) target = $region17
    $region16: #{tpu_custom_call.1} parent=1 // pred_region
      _
    $region17: #{tpu_custom_call.1} parent=1 // pred_fallthru
      _
    // Predicated region
    $region18: #{tpu_custom_call.1} parent=1 // pred_check
      _
    $region19: #{tpu_custom_call.1} parent=1 // pred_check_branch
      %25 = sbr.rel (0) target = $region21
    $region20: #{tpu_custom_call.1} parent=1 // pred_region
      _
    $region21: #{tpu_custom_call.1} parent=1 // pred_fallthru
      _
    // Predicated region
    $region22: #{tpu_custom_call.1} parent=1 // pred_check
      _
    $region23: #{tpu_custom_call.1} parent=1 // pred_check_branch
      %27 = sbr.rel (0) target = $region25
    $region24: #{tpu_custom_call.1} parent=1 // pred_region
      _
    $region25: #{tpu_custom_call.1} parent=1 // pred_fallthru
      _
    // Predicated region
    $region26: #{tpu_custom_call.1} parent=1 // pred_check
      _
    $region27: #{tpu_custom_call.1} parent=1 // pred_check_branch
      %29 = sbr.rel (0) target = $region29
    $region28: #{tpu_custom_call.1} parent=1 // pred_region
      _
    $region29: #{tpu_custom_call.1} parent=1 // pred_fallthru
      _
    // Predicated region
    $region30: #{tpu_custom_call.1} parent=1 // pred_check
      _
    $region31: #{tpu_custom_call.1} parent=1 // pred_check_branch
      %31 = sbr.rel (0) target = $region33
    $region32: #{tpu_custom_call.1} parent=1 // pred_region
      _
    $region33: #{tpu_custom_call.1} parent=1 // pred_fallthru
      _
    // Predicated region
    $region34: #{tpu_custom_call.1} parent=1 // pred_check
      _
    $region35: #{tpu_custom_call.1} parent=1 // pred_check_branch
      %33 = sbr.rel (0) target = $region37
    $region36: #{tpu_custom_call.1} parent=1 // pred_region
      _
    $region37: #{tpu_custom_call.1} parent=1 // pred_fallthru
      _
    // Predicated region
    $region38: #{tpu_custom_call.1} parent=1 // pred_check
      _
    $region39: #{tpu_custom_call.1} parent=1 // pred_check_branch
      %35 = sbr.rel (0) target = $region41
    $region40: #{tpu_custom_call.1} parent=1 // pred_region
      _
    $region41: #{tpu_custom_call.1} parent=1 // pred_fallthru
      _
    %v36 = vld [vmem:[%s0] sm:$0x1]
    %v37 = vld [vmem:[%s0 + $0x1] sm:$0x1]
    %vm38 = vcmp.ne.f32.partialorder %v36, %v36
    %vm39 = vcmp.ne.f32.partialorder %v37, %v37
    %vm40 = vmor %vm38, %vm39
    %v41 = vld [vmem:[%s1] sm:$0xf]
    %v42 = vlaneseq
    %v43 = vshrl.u32 %v42, 7
    %v44 = vsub.s32 0, %v43
    %v45 = vrot.slane %v36, %v44
    %47 = vset.pattern.permute.xlu0 0
    %48 = vperm.xlu0 %47, %v41
    %v49 = vpop.permute.xlu0 %48
    %v51 = vsub.f32 %v45, %v49
    %v52 = vld [vmem:[%s2] sm:$0xf]
    %v53 = vlaneseq
    %v54 = vshrl.u32 %v53, 7
    %v55 = vsub.s32 0, %v54
    %v56 = vrot.slane %v37, %v55
    %58 = vset.pattern.permute.xlu0 0
    %59 = vperm.xlu0 %58, %v52
    %v60 = vpop.permute.xlu0 %59
    %v62 = vsub.f32 %v56, %v60
    %v63 = vld [vmem:[%s3] sm:$0xf]
    %65 = vset.pattern.permute.xlu0 0
    %66 = vperm.xlu0 %65, %v63
    %v67 = vpop.permute.xlu0 %66
    %v69 = vmul.f32 %v67, %v51
    %v70 = vld [vmem:[%s4] sm:$0xf]
    %72 = vset.pattern.permute.xlu0 0
    %73 = vperm.xlu0 %72, %v70
    %v74 = vpop.permute.xlu0 %73
    %v76 = vmul.f32 %v74, %v62
    %v77 = vadd.f32 %v69, %v76
    %v78 = vld [vmem:[%s5] sm:$0xf]
    %80 = vset.pattern.permute.xlu0 0
    %81 = vperm.xlu0 %80, %v78
    %v82 = vpop.permute.xlu0 %81
    %v84 = vmul.f32 %v82, %v51
    %v85 = vld [vmem:[%s6] sm:$0xf]
    %87 = vset.pattern.permute.xlu0 0
    %88 = vperm.xlu0 %87, %v85
    %v89 = vpop.permute.xlu0 %88
    %v91 = vmul.f32 %v89, %v62
    %v92 = vadd.f32 %v84, %v91
    %v93 = vmul.f32 %v77, %v77
    %v94 = vmul.f32 %v92, %v92
    %v95 = vadd.f32 %v93, %v94
    %v96 = vld [vmem:[%s7] sm:$0xf]
    %98 = vset.pattern.permute.xlu0 0
    %99 = vperm.xlu0 %98, %v96
    %v100 = vpop.permute.xlu0 %99
    %v102 = vsub.f32 %v100, %v95
    %v103 = vld [vmem:[%s8] sm:$0xf]
    %105 = vset.pattern.permute.xlu0 0
    %106 = vperm.xlu0 %105, %v103
    %v107 = vpop.permute.xlu0 %106
    %v109 = vmax.f32 %v102, %v107
    %v110 = vsub.f32 %v102, %v107
    %v111 = vand.u32 2147483647, %v110
    %v112 = vsub.f32 0.0, %v111
    %v113 = vmul.f32 %v112, 1.442695
    %v114 = vpow.pop %v113
    %v115 = vadd.f32 %v114, 1.0
    %v116 = vlog2.pop %v115
    %v117 = vmul.f32 %v116, 0.6931472
    %v118 = vmul.f32 -0.5, %v114
    %v119 = vadd.f32 %v118, 1.0
    %v120 = vmul.f32 %v119, %v114
    %v121 = vand.u32 2147483647, %v114
    %vm122 = vcmp.lt.f32.partialorder %v121, 0.0004427343
    %v123 = vsel %vm122, %v120, %v117
    %v124 = vadd.f32 %v109, %v123
    %v125 = vld [vmem:[%s9] sm:$0xf]
    %v126 = vsel %vm40, 1, 0
    %v127 = vlaneseq
    %v128 = vshrl.u32 %v127, 7
    %v129 = vsub.s32 0, %v128
    %v130 = vrot.slane %v126, %v129
    %vm131 = vcmp.eq.s32.totalorder %v130, 1
    %133 = vset.pattern.permute.xlu0 0
    %134 = vperm.xlu0 %133, %v125
    %v135 = vpop.permute.xlu0 %134
    %v137 = vsel %vm131, %v135, %v124
    %138 = vst [vmem:[#allocation2] sm:$0xf] %v137
    // Predicated region
    $region42: #{tpu_custom_call.1} parent=1 // pred_check
      _
    $region43: #{tpu_custom_call.1} parent=1 // pred_check_branch
      %140 = sbr.rel (0) target = $region45
    $region44: #{tpu_custom_call.1} parent=1 // pred_region
      %s142 = ssub.s32 64, 64
      %143 = vsyncadd [#allocation3], %s142
      %s145 = sshll.u32 [#allocation2], 4
      %s146 = int_to_ptr.vmem [resolvable:$true] %s145
      %148 = dma.vmem_to_hbm [thread:$0]  %s146, 64, %s10, [#allocation3]
    $region45: #{tpu_custom_call.1} parent=1 // pred_fallthru
      _
    // Predicated region
    $region46: #{tpu_custom_call.1} parent=1 // pred_check
      _
    $region47: #{tpu_custom_call.1} parent=1 // pred_check_branch
      %150 = sbr.rel (0) target = $region49
    $region48: #{tpu_custom_call.1} parent=1 // pred_region
      %151 = dma.done [#allocation3], 64
    $region49: #{tpu_custom_call.1} parent=1 // pred_fallthru
      _
    %152 = vsyncpa [#allocation3], 1

</llo_original>
